<compile_context>
chip_gen: v6e
topology: v6e:2x2x1
jax: 0.10.0
libtpu: 0.0.40
codegen_flags: <defaults>
</compile_context>

<pallas_src>
import functools

import jax
import jax.numpy as jnp
import numpy as np
from jax import lax
from jax.experimental import pallas as pl
from jax.experimental.pallas import tpu as pltpu

_LANES = 128
# Per-input block budget in f32-equivalent elements (~3 MiB).  With 2 inputs
# x 2 pipeline buffers plus f32 temporaries this keeps total VMEM ~20 MiB:
# fits v7x's 32 MiB scoped default and v5e/v6e once the limit is set to 32 MiB.
_BLOCK_ELEMS = 768 * 1024
_VMEM_LIMIT_BYTES = 32 * 1024 * 1024


def _round_up(x, m):
    return (x + m - 1) // m * m


def _sublane_multiple(*dtypes):
    # f32 -> 8, bf16/fp16 -> 16, int8/fp8 -> 32 (packed sublane tiling).
    m = 8
    for dt in dtypes:
        m = max(m, 8 * (4 // max(1, np.dtype(dt).itemsize)))
    return m


def _accumulate(p_ref, t_ref, inter_acc, union_acc, *, d_tile, n_d_total,
                d_total, td, activation, needs_mask):
    """Accumulate per-row partial inter/union for the current (tb, td) block."""
    p = p_ref[...].astype(jnp.float32)
    t = t_ref[...].astype(jnp.float32)
    if activation == "sigmoid":
        p = jax.nn.sigmoid(p)
    # activation == 'none' -> identity.

    def _acc(pv, tv):
        inter_acc[...] += jnp.sum(pv * tv, axis=-1, keepdims=True)
        union_acc[...] += jnp.sum(pv + tv, axis=-1, keepdims=True)

    if needs_mask:
        # Only the tail D tile needs the lane mask; every other tile takes the
        # unmasked path (saves iota + compare + 2 selects per element).
        is_tail = d_tile == n_d_total - 1

        @pl.when(jnp.logical_not(is_tail))
        def _():
            _acc(p, t)

        @pl.when(is_tail)
        def _():
            lane = lax.broadcasted_iota(jnp.int32, p.shape, 1)
            valid = (d_tile * td + lane) < d_total
            # Mask BEFORE the multiply so stale-VMEM lanes never leak in.
            _acc(jnp.where(valid, p, 0.0), jnp.where(valid, t, 0.0))
    else:
        _acc(p, t)


def _dice_fused_kernel(p_ref, t_ref, loss_ref, inter_acc, union_acc, *,
                       eps, d_total, td, activation, needs_mask):
    """Main path: grid (n_b, n_d); emits one lane-dense (tb, 128) loss block."""
    d = pl.program_id(1)
    n_d = pl.num_programs(1)

    @pl.when(d == 0)
    def _():
        inter_acc[...] = jnp.zeros_like(inter_acc)
        union_acc[...] = jnp.zeros_like(union_acc)

    _accumulate(p_ref, t_ref, inter_acc, union_acc, d_tile=d, n_d_total=n_d,
                d_total=d_total, td=td, activation=activation,
                needs_mask=needs_mask)

    @pl.when(d == n_d - 1)
    def _():
        inter = inter_acc[...]
        union = union_acc[...]
        # Fused epilogue.  Exact divide (NOT approx reciprocal) to keep
        # 1e-6-level accuracy.
        loss = 1.0 - (2.0 * inter + eps) / (union + eps)
        loss_ref[...] = jnp.broadcast_to(loss, loss_ref.shape)


def _dice_split_kernel(p_ref, t_ref, inter_ref, union_ref, inter_acc,
                       union_acc, *, d_total, td, n_d_total, n_d_inner,
                       activation, needs_mask):
    """Small-N / large-D path: grid (n_s=2 parallel D chunks, n_d_inner).

    Emits per-chunk partial inter/union slabs; combined (tiny) in JAX.
    """
    s = pl.program_id(0)
    d = pl.program_id(1)
    d_tile = s * n_d_inner + d

    @pl.when(d == 0)
    def _():
        inter_acc[...] = jnp.zeros_like(inter_acc)
        union_acc[...] = jnp.zeros_like(union_acc)

    # When n_d_total is odd the last chunk has one padded (clamped) tile:
    # its DMA re-fetches a valid tile, but the accumulation is skipped here.
    @pl.when(d_tile < n_d_total)
    def _():
        _accumulate(p_ref, t_ref, inter_acc, union_acc, d_tile=d_tile,
                    n_d_total=n_d_total, d_total=d_total, td=td,
                    activation=activation, needs_mask=needs_mask)

    @pl.when(d == n_d_inner - 1)
    def _():
        inter_ref[...] = jnp.broadcast_to(inter_acc[...], inter_ref.shape)
        union_ref[...] = jnp.broadcast_to(union_acc[...], union_ref.shape)


def dice_loss(logits, target, *, eps=1e-7, activation="none", reduction="mean"):
    assert logits.shape == target.shape
    if activation not in ("none", "sigmoid"):
        # TODO(synk): 'softmax2d' needs the channel axis, which the flattened (N, D) view drops.
        raise NotImplementedError(f"activation={activation!r}")

    # bf16 / fp16 / int8 stream straight through (kernel upcasts to f32);
    # only 8-byte or bool dtypes get pre-cast.
    def _narrow(x):
        dt = np.dtype(x.dtype)
        if dt.itemsize > 4 or dt == np.bool_:
            return x.astype(jnp.float32)
        return x

    logits = _narrow(logits)
    target = _narrow(target)

    N = logits.shape[0]
    D = int(np.prod(logits.shape[1:])) if logits.ndim > 1 else 1

    p = logits.reshape(N, D)
    t = target.reshape(N, D)

    # --- batch tile ---------------------------------------------------------
    sub = _sublane_multiple(p.dtype, t.dtype)
    if N <= sub:
        tb = N                            # single full-dim batch block
    else:
        # >= 2 batch blocks (both v7x TensorCores stream), <= 64 rows/block,
        # aligned to the packed-sublane multiple of the narrowest input dtype.
        tb = min(64, max(sub, _round_up(pl.cdiv(N, 2), sub)))
    n_b = pl.cdiv(N, tb)

    # --- feature tile -------------------------------------------------------
    max_td = max(_LANES, (_BLOCK_ELEMS // tb) // _LANES * _LANES)
    if D <= max_td:
        td, needs_mask = D, False         # full-D block; no mask
    else:
        td, needs_mask = max_td, (D % max_td != 0)
    n_d = pl.cdiv(D, td)

    bytes_accessed = (p.size * np.dtype(p.dtype).itemsize
                      + t.size * np.dtype(t.dtype).itemsize
                      + N * _LANES * 4)
    cost = pl.CostEstimate(
        flops=4 * N * D,
        transcendentals=(N * D if activation == "sigmoid" else 0),
        bytes_accessed=bytes_accessed)
    cparams = pltpu.CompilerParams(
        dimension_semantics=("parallel", "arbitrary"),
        vmem_limit_bytes=_VMEM_LIMIT_BYTES)

    if n_b > 1 or n_d == 1:
        # ----- main path: fused epilogue, single (N, 128) loss slab ---------
        kernel = functools.partial(
            _dice_fused_kernel, eps=eps, d_total=D, td=td,
            activation=activation, needs_mask=needs_mask)
        loss_slab = pl.pallas_call(
            kernel,
            out_shape=jax.ShapeDtypeStruct((N, _LANES), jnp.float32),
            grid_spec=pltpu.PrefetchScalarGridSpec(
                num_scalar_prefetch=0,
                grid=(n_b, n_d),          # reduction (D) axis last
                in_specs=[
                    pl.BlockSpec((tb, td), lambda b, d: (b, d)),
                    pl.BlockSpec((tb, td), lambda b, d: (b, d)),
                ],
                out_specs=pl.BlockSpec((tb, _LANES), lambda b, d: (b, 0)),
                scratch_shapes=[
                    pltpu.VMEM((tb, 1), jnp.float32),
                    pltpu.VMEM((tb, 1), jnp.float32),
                ],
            ),
            compiler_params=cparams,
            cost_estimate=cost,
        )(p, t)
        loss = loss_slab[:, 0]
    else:
        # ----- small-N / large-D path: split D tiles into 2 parallel chunks -
        # (n_b == 1 would feed only one v7x TensorCore otherwise.)
        n_s = 2
        n_d_inner = pl.cdiv(n_d, n_s)
        last_tile = n_d - 1

        def in_map(s, d):
            # Clamp so the padded tile of the last chunk never DMAs OOB; the
            # kernel skips its accumulation.
            return (0, jnp.minimum(s * n_d_inner + d, last_tile))

        kernel = functools.partial(
            _dice_split_kernel, d_total=D, td=td, n_d_total=n_d,
            n_d_inner=n_d_inner, activation=activation, needs_mask=needs_mask)
        inter_sl, union_sl = pl.pallas_call(
            kernel,
            out_shape=(
                jax.ShapeDtypeStruct((N, n_s * _LANES), jnp.float32),
                jax.ShapeDtypeStruct((N, n_s * _LANES), jnp.float32),
            ),
            grid_spec=pltpu.PrefetchScalarGridSpec(
                num_scalar_prefetch=0,
                grid=(n_s, n_d_inner),
                in_specs=[
                    pl.BlockSpec((tb, td), in_map),
                    pl.BlockSpec((tb, td), in_map),
                ],
                out_specs=[
                    pl.BlockSpec((tb, _LANES), lambda s, d: (0, s)),
                    pl.BlockSpec((tb, _LANES), lambda s, d: (0, s)),
                ],
                scratch_shapes=[
                    pltpu.VMEM((tb, 1), jnp.float32),
                    pltpu.VMEM((tb, 1), jnp.float32),
                ],
            ),
            compiler_params=cparams,
            cost_estimate=cost,
        )(p, t)
        inter = inter_sl.reshape(N, n_s, _LANES)[:, :, 0].sum(axis=1)
        union = union_sl.reshape(N, n_s, _LANES)[:, :, 0].sum(axis=1)
        loss = 1.0 - (2.0 * inter + eps) / (union + eps)

    if reduction == "mean":
        return jnp.mean(loss)
    elif reduction == "sum":
        return jnp.sum(loss)
    elif reduction == "none":
        return loss
    else:
        raise NotImplementedError(f"reduction={reduction!r}")


def _dice_ref(logits, target, eps=1e-7, activation="none", reduction="mean"):
    N = logits.shape[0]
    p = logits.reshape(N, -1).astype(jnp.float32)
    if activation == "sigmoid":
        p = jax.nn.sigmoid(p)
    t = target.reshape(N, -1).astype(jnp.float32)
    inter = jnp.sum(p * t, axis=1)
    union = jnp.sum(p, axis=1) + jnp.sum(t, axis=1)
    loss = 1.0 - (2.0 * inter + eps) / (union + eps)
    if reduction == "mean":
        return jnp.mean(loss)
    elif reduction == "sum":
        return jnp.sum(loss)
    return loss


if __name__ == "__main__":
    key = jax.random.PRNGKey(0)

    # 1) Primary case: NCHW f32 inputs, like the PyTorch module receives.
    k1, k2 = jax.random.split(key)
    N, C, H, W = 2, 4, 16, 16
    logits = jax.nn.sigmoid(jax.random.normal(k1, (N, C, H, W), dtype=jnp.float32))
    target = (jax.random.uniform(k2, (N, C, H, W)) > 0.5).astype(jnp.float32)
    loss = jax.block_until_ready(dice_loss(logits, target, eps=1e-7))
    ref = _dice_ref(logits, target, eps=1e-7)
    np.testing.assert_allclose(np.asarray(loss), np.asarray(ref), rtol=1e-5, atol=1e-6)

    # 2) Batch not a multiple of 8 (2 batch blocks, partial tail), odd D,
    #    sigmoid activation, sum reduction.
    k3, k4 = jax.random.split(k1)
    logits2 = jax.random.normal(k3, (10, 3, 7, 9), dtype=jnp.float32)
    target2 = (jax.random.uniform(k4, (10, 3, 7, 9)) > 0.5).astype(jnp.float32)
    loss2 = jax.block_until_ready(
        dice_loss(logits2, target2, activation="sigmoid", reduction="sum"))
    ref2 = _dice_ref(logits2, target2, activation="sigmoid", reduction="sum")
    np.testing.assert_allclose(np.asarray(loss2), np.asarray(ref2), rtol=1e-5, atol=1e-5)

    # 3) bf16 logits streamed straight through (f32 target), 'none' reduction.
    k5, k6 = jax.random.split(k2)
    logits3 = jax.nn.sigmoid(jax.random.normal(k5, (6, 3, 8, 8))).astype(jnp.bfloat16)
    target3 = (jax.random.uniform(k6, (6, 3, 8, 8)) > 0.5).astype(jnp.float32)
    loss3 = jax.block_until_ready(dice_loss(logits3, target3, reduction="none"))
    ref3 = _dice_ref(logits3, target3, reduction="none")
    np.testing.assert_allclose(np.asarray(loss3), np.asarray(ref3), rtol=1e-5, atol=1e-6)

    # 4) Small batch + large D: exercises the D-tiled path, the tail lane mask,
    #    and the 2-chunk "parallel" D split (two-stage reduction).
    k7, k8 = jax.random.split(k3)
    logits4 = jax.nn.sigmoid(jax.random.normal(k7, (2, 3, 513, 513), dtype=jnp.float32))
    target4 = (jax.random.uniform(k8, (2, 3, 513, 513)) > 0.5).astype(jnp.float32)
    loss4 = jax.block_until_ready(dice_loss(logits4, target4))
    ref4 = _dice_ref(logits4, target4)
    np.testing.assert_allclose(np.asarray(loss4), np.asarray(ref4), rtol=1e-5, atol=1e-6)

    # 5) Larger batch (tb=32, 2 batch blocks with a partial tail).
    k9, k10 = jax.random.split(k4)
    logits5 = jax.nn.sigmoid(jax.random.normal(k9, (50, 4, 32, 32), dtype=jnp.float32))
    target5 = (jax.random.uniform(k10, (50, 4, 32, 32)) > 0.5).astype(jnp.float32)
    loss5 = jax.block_until_ready(dice_loss(logits5, target5))
    ref5 = _dice_ref(logits5, target5)
    np.testing.assert_allclose(np.asarray(loss5), np.asarray(ref5), rtol=1e-5, atol=1e-6)

    print("KERNEL_OK")
</pallas_src>

<mosaic_0001>
module attributes {stable_mosaic.version = 11 : i64} {
  func.func @_dice_fused_kernel(%arg0: i32, %arg1: i32, %arg2: memref<2x1024xf32, #tpu.memory_space<vmem>>, %arg3: memref<2x1024xf32, #tpu.memory_space<vmem>>, %arg4: memref<2x128xf32, #tpu.memory_space<vmem>>, %arg5: memref<2x1xf32, #tpu.memory_space<vmem>>, %arg6: memref<2x1xf32, #tpu.memory_space<vmem>>) attributes {dimension_semantics = [#tpu.dimension_semantics<parallel>, #tpu.dimension_semantics<arbitrary>], iteration_bounds = array<i64: 1, 1>, scalar_prefetch = 0 : i64, scratch_operands = 2 : i64, tpu.core_type = #tpu.core_type<tc>, window_params = [{transform_indices = @transform_0, window_bounds = array<i64: 2, 1024>}, {transform_indices = @transform_1, window_bounds = array<i64: 2, 1024>}, {transform_indices = @transform_2, window_bounds = array<i64: 2, 128>}]} {
    %c0_i32 = arith.constant 0 : i32
    %0 = arith.cmpi eq, %arg1, %c0_i32 : i32
    %1 = arith.extui %0 : i1 to i32
    %c0_i32_0 = arith.constant 0 : i32
    %2 = arith.cmpi ne, %1, %c0_i32_0 : i32
    scf.if %2 {
      %cst_15 = arith.constant 0.000000e+00 : f32
      %20 = vector.broadcast %cst_15 : f32 to vector<2x1xf32>
      %c0_16 = arith.constant 0 : index
      %c0_17 = arith.constant 0 : index
      %21 = vector.load %arg5[%c0_16, %c0_17] : memref<2x1xf32, #tpu.memory_space<vmem>>, vector<2x1xf32>
      tpu.vector_store %arg5[%c0_16, %c0_17], %20 {strides = array<i32>} : memref<2x1xf32, #tpu.memory_space<vmem>>, vector<2x1xf32>,
      %cst_18 = arith.constant 0.000000e+00 : f32
      %22 = vector.broadcast %cst_18 : f32 to vector<2x1xf32>
      %c0_19 = arith.constant 0 : index
      %c0_20 = arith.constant 0 : index
      %23 = vector.load %arg6[%c0_19, %c0_20] : memref<2x1xf32, #tpu.memory_space<vmem>>, vector<2x1xf32>
      tpu.vector_store %arg6[%c0_19, %c0_20], %22 {strides = array<i32>} : memref<2x1xf32, #tpu.memory_space<vmem>>, vector<2x1xf32>,
    } else {
    }
    %c0 = arith.constant 0 : index
    %c0_1 = arith.constant 0 : index
    %3 = vector.load %arg2[%c0, %c0_1] : memref<2x1024xf32, #tpu.memory_space<vmem>>, vector<2x1024xf32>
    %c0_2 = arith.constant 0 : index
    %c0_3 = arith.constant 0 : index
    %4 = vector.load %arg3[%c0_2, %c0_3] : memref<2x1024xf32, #tpu.memory_space<vmem>>, vector<2x1024xf32>
    %c0_4 = arith.constant 0 : index
    %c0_5 = arith.constant 0 : index
    %5 = vector.load %arg5[%c0_4, %c0_5] : memref<2x1xf32, #tpu.memory_space<vmem>>, vector<2x1xf32>
    %6 = arith.mulf %3, %4 : vector<2x1024xf32>
    %cst = arith.constant dense<0.000000e+00> : vector<2xf32>
    %7 = vector.multi_reduction <add>, %6, %cst [1] : vector<2x1024xf32> to vector<2xf32>
    %8 = vector.shape_cast %7 : vector<2xf32> to vector<2x1xf32>
    %9 = arith.addf %5, %8 : vector<2x1xf32>
    %c0_6 = arith.constant 0 : index
    %c0_7 = arith.constant 0 : index
    %10 = vector.load %arg5[%c0_6, %c0_7] : memref<2x1xf32, #tpu.memory_space<vmem>>, vector<2x1xf32>
    tpu.vector_store %arg5[%c0_6, %c0_7], %9 {strides = array<i32>} : memref<2x1xf32, #tpu.memory_space<vmem>>, vector<2x1xf32>,
    %c0_8 = arith.constant 0 : index
    %c0_9 = arith.constant 0 : index
    %11 = vector.load %arg6[%c0_8, %c0_9] : memref<2x1xf32, #tpu.memory_space<vmem>>, vector<2x1xf32>
    %12 = arith.addf %3, %4 : vector<2x1024xf32>
    %cst_10 = arith.constant dense<0.000000e+00> : vector<2xf32>
    %13 = vector.multi_reduction <add>, %12, %cst_10 [1] : vector<2x1024xf32> to vector<2xf32>
    %14 = vector.shape_cast %13 : vector<2xf32> to vector<2x1xf32>
    %15 = arith.addf %11, %14 : vector<2x1xf32>
    %c0_11 = arith.constant 0 : index
    %c0_12 = arith.constant 0 : index
    %16 = vector.load %arg6[%c0_11, %c0_12] : memref<2x1xf32, #tpu.memory_space<vmem>>, vector<2x1xf32>
    tpu.vector_store %arg6[%c0_11, %c0_12], %15 {strides = array<i32>} : memref<2x1xf32, #tpu.memory_space<vmem>>, vector<2x1xf32>,
    %c0_i32_13 = arith.constant 0 : i32
    %17 = arith.cmpi eq, %arg1, %c0_i32_13 : i32
    %18 = arith.extui %17 : i1 to i32
    %c0_i32_14 = arith.constant 0 : i32
    %19 = arith.cmpi ne, %18, %c0_i32_14 : i32
    scf.if %19 {
      %c0_15 = arith.constant 0 : index
      %c0_16 = arith.constant 0 : index
      %20 = vector.load %arg5[%c0_15, %c0_16] : memref<2x1xf32, #tpu.memory_space<vmem>>, vector<2x1xf32>
      %c0_17 = arith.constant 0 : index
      %c0_18 = arith.constant 0 : index
      %21 = vector.load %arg6[%c0_17, %c0_18] : memref<2x1xf32, #tpu.memory_space<vmem>>, vector<2x1xf32>
      %cst_19 = arith.constant 2.000000e+00 : f32
      %22 = vector.broadcast %cst_19 : f32 to vector<2x1xf32>
      %23 = arith.mulf %22, %20 : vector<2x1xf32>
      %cst_20 = arith.constant 1.000000e-07 : f32
      %24 = vector.broadcast %cst_20 : f32 to vector<2x1xf32>
      %25 = arith.addf %23, %24 : vector<2x1xf32>
      %cst_21 = arith.constant 1.000000e-07 : f32
      %26 = vector.broadcast %cst_21 : f32 to vector<2x1xf32>
      %27 = arith.addf %21, %26 : vector<2x1xf32>
      %28 = arith.divf %25, %27 : vector<2x1xf32>
      %cst_22 = arith.constant 1.000000e+00 : f32
      %29 = vector.broadcast %cst_22 : f32 to vector<2x1xf32>
      %30 = arith.subf %29, %28 : vector<2x1xf32>
      %31 = vector.shape_cast %30 : vector<2x1xf32> to vector<2x1xf32>
      %32 = vector.broadcast %31 : vector<2x1xf32> to vector<2x128xf32>
      %c0_23 = arith.constant 0 : index
      %c0_24 = arith.constant 0 : index
      %33 = vector.load %arg4[%c0_23, %c0_24] : memref<2x128xf32, #tpu.memory_space<vmem>>, vector<2x128xf32>
      tpu.vector_store %arg4[%c0_23, %c0_24], %32 {strides = array<i32>} : memref<2x128xf32, #tpu.memory_space<vmem>>, vector<2x128xf32>,
    } else {
    }
    return
  }
  func.func @transform_0(%arg0: i32, %arg1: i32) -> (i32, i32) {
    %c0_i32 = arith.constant 0 : i32
    return %arg0, %arg1 : i32, i32
  }
  func.func @transform_1(%arg0: i32, %arg1: i32) -> (i32, i32) {
    %c0_i32 = arith.constant 0 : i32
    return %arg0, %arg1 : i32, i32
  }
  func.func @transform_2(%arg0: i32, %arg1: i32) -> (i32, i32) {
    %c0_i32 = arith.constant 0 : i32
    %c0_i32_0 = arith.constant 0 : i32
    return %arg0, %c0_i32 : i32, i32
  }
}

</mosaic_0001>

<llo_original>
// kernel: tpu_custom_call.1
$region0: #{tpu_custom_call.1}
  #allocation0 [shape = 'u32[]', space=smem, size = 0x4, offset = 0x4, fixed_abs, tag = 'smem constant byte address 0x4 - core index']
  #allocation1 [shape = 'u32[144,128]{1,0:T(1,128)}', space=vmem, size = 0x12000, scoped, tag = 'internal scratch']
  #allocation2 [shape = 'f32[2,1]{1,0:T(2,128)}', space=vmem, size = 0x400, scoped, tag = 'scratch operand']
  #allocation3 [shape = 'f32[2,1]{1,0:T(2,128)}', space=vmem, size = 0x400, scoped, tag = 'scratch operand']
  %s0 = inlined_call_operand.hbm [shape: f32[2,1024], index: 0, kind: input, shape index: {}]
  %s1 = inlined_call_operand.hbm [shape: f32[2,1024], index: 1, kind: input, shape index: {}]
  %s2 = inlined_call_operand.hbm [shape: f32[2,128], index: 2, kind: output, shape index: {}]
  %s3 = sld [smem:[#allocation0]]
  $region34: #{tpu_custom_call.1} parent=0
    _
  %s5 = ssub.s32 1, %s3
  %s6 = scalar_select 0, %s5, %s3
  $region1: #{tpu_custom_call.1} parent=0
    #allocation4 [shape = 'u8[8192]{0}', space=vmem, size = 0x2000, scoped, tag = 'input window, operand 0, single buffered']
    #allocation5 [shape = 's32[1]{0}', space=sflag, size = 0x4, scoped, tag = 'scoped memory for tpu_custom_call.1']
    #allocation6 [shape = 's32[1]{0}', space=sflag, size = 0x4, scoped, tag = 'scoped memory for tpu_custom_call.1']
    #allocation7 [shape = 'u8[8192]{0}', space=vmem, size = 0x2000, scoped, tag = 'input window, operand 1, single buffered']
    #allocation8 [shape = 's32[1]{0}', space=sflag, size = 0x4, scoped, tag = 'scoped memory for tpu_custom_call.1']
    #allocation9 [shape = 'u8[1024]{0}', space=vmem, size = 0x400, scoped, tag = 'output window, operand 0, single buffered']
    %7 = vsyncpa [#allocation5], 0
    %8 = vsyncpa [#allocation8], 0
    %9 = vsyncpa [#allocation6], 0
    // Predicated region
    $region2: #{tpu_custom_call.1} parent=1 // pred_check
      _
    $region3: #{tpu_custom_call.1} parent=1 // pred_check_branch
      %11 = sbr.rel (0) target = $region5
    $region4: #{tpu_custom_call.1} parent=1 // pred_region
      %s13 = ssub.s32 256, 256
      %14 = vsyncadd [#allocation5], %s13
      %s16 = sshll.u32 [#allocation4], 4
      %s17 = int_to_ptr.vmem [resolvable:$true] %s16
      %19 = dma.hbm_to_vmem [thread:$0]  %s0, 256, %s17, [#allocation5]
    $region5: #{tpu_custom_call.1} parent=1 // pred_fallthru
      _
    // Predicated region
    $region6: #{tpu_custom_call.1} parent=1 // pred_check
      _
    $region7: #{tpu_custom_call.1} parent=1 // pred_check_branch
      %21 = sbr.rel (0) target = $region9
    $region8: #{tpu_custom_call.1} parent=1 // pred_region
      %s23 = ssub.s32 256, 256
      %24 = vsyncadd [#allocation8], %s23
      %s26 = sshll.u32 [#allocation7], 4
      %s27 = int_to_ptr.vmem [resolvable:$true] %s26
      %29 = dma.hbm_to_vmem [thread:$0]  %s1, 256, %s27, [#allocation8]
    $region9: #{tpu_custom_call.1} parent=1 // pred_fallthru
      _
    // Predicated region
    $region10: #{tpu_custom_call.1} parent=1 // pred_check
      _
    $region11: #{tpu_custom_call.1} parent=1 // pred_check_branch
      %31 = sbr.rel (0) target = $region13
    $region12: #{tpu_custom_call.1} parent=1 // pred_region
      %32 = dma.done [#allocation5], 256
    $region13: #{tpu_custom_call.1} parent=1 // pred_fallthru
      _
    // Predicated region
    $region14: #{tpu_custom_call.1} parent=1 // pred_check
      _
    $region15: #{tpu_custom_call.1} parent=1 // pred_check_branch
      %34 = sbr.rel (0) target = $region17
    $region16: #{tpu_custom_call.1} parent=1 // pred_region
      %35 = dma.done [#allocation8], 256
    $region17: #{tpu_custom_call.1} parent=1 // pred_fallthru
      _
    %p36 = scmp.eq.s32.totalorder 0, 0
    // Predicated region
    $region18: #{tpu_custom_call.1} parent=1 // pred_check
      %p37 = pneg %p36
    $region19: #{tpu_custom_call.1} parent=1 // pred_check_branch
      %39 = sbr.rel (%p37) target = $region21
    $region20: #{tpu_custom_call.1} parent=1 // pred_region
      %vm40 = vcmask 1024
      %41 = vst.msk [vmem:[#allocation2] sm:$0x3] %vm40, 0.0
      %42 = vst.msk [vmem:[#allocation3] sm:$0x3] %vm40, 0.0
    $region21: #{tpu_custom_call.1} parent=1 // pred_fallthru
      _
    %v43 = vld [vmem:[#allocation4] sm:$0xff]
    %v44 = vld [vmem:[#allocation4 + $0x8] sm:$0xff]
    %v45 = vld [vmem:[#allocation7] sm:$0xff]
    %v46 = vld [vmem:[#allocation7 + $0x8] sm:$0xff]
    %v47 = vld [vmem:[#allocation2] sm:$0x3]
    %v48 = vmul.f32 %v43, %v45
    %v49 = vmul.f32 %v44, %v46
    %v52 = vcombine.high %v48, %v48
    %v54 = vunpack.c.l.s4 1983009808
    %v55 = vunpack.c.0.s8 %v54
    %v56 = vlaneseq
    %v57 = vshrl.u32 %v56, 7
    %v58 = vsub.s32 %v55, %v57
    %v59 = vrot.slane %v48, %v58
    %v61 = vunpack.c.l.s4 1983009808
    %v62 = vunpack.c.0.s8 %v61
    %v63 = vlaneseq
    %v64 = vshrl.u32 %v63, 7
    %v65 = vsub.s32 %v62, %v64
    %v66 = vrot.slane %v52, %v65
    %v67 = vcombine.high %v59, %v59
    %v68 = vcombine.high %v66, %v66
    %v69 = vcombine.high %v49, %v49
    %v71 = vunpack.c.l.s4 1983009808
    %v72 = vunpack.c.0.s8 %v71
    %v73 = vlaneseq
    %v74 = vshrl.u32 %v73, 7
    %v75 = vsub.s32 %v72, %v74
    %v76 = vrot.slane %v49, %v75
    %v78 = vunpack.c.l.s4 1983009808
    %v79 = vunpack.c.0.s8 %v78
    %v80 = vlaneseq
    %v81 = vshrl.u32 %v80, 7
    %v82 = vsub.s32 %v79, %v81
    %v83 = vrot.slane %v69, %v82
    %v84 = vcombine.high %v76, %v76
    %v85 = vcombine.high %v83, %v83
    %vm94 = vcmask 1041408
    %v95 = vsel %vm94, %v59, 0.0
    %v96 = vsel %vm94, %v67, 0.0
    %v97 = vadd.f32 %v95, %v96
    %v98 = vsel %vm94, %v66, 0.0
    %v99 = vadd.f32 %v97, %v98
    %v100 = vsel %vm94, %v68, 0.0
    %v101 = vadd.f32 %v99, %v100
    %v102 = vsel %vm94, %v76, 0.0
    %v103 = vadd.f32 %v101, %v102
    %v104 = vsel %vm94, %v84, 0.0
    %v105 = vadd.f32 %v103, %v104
    %v106 = vsel %vm94, %v83, 0.0
    %v107 = vadd.f32 %v105, %v106
    %v108 = vsel %vm94, %v85, 0.0
    %v109 = vadd.f32 %v107, %v108
    %110 = vadd.xlane.f32.xlu0 %v109
    %v111 = vpop.xlane.xlu0 %110
    %v112 = vadd.f32 %v47, %v111
    %vm113 = vcmask 1024
    %114 = vst.msk [vmem:[#allocation2] sm:$0x3] %vm113, %v112
    %v115 = vld [vmem:[#allocation3] sm:$0x3]
    %v116 = vadd.f32 %v43, %v45
    %v117 = vadd.f32 %v44, %v46
    %v120 = vcombine.high %v116, %v116
    %v122 = vunpack.c.l.s4 1983009808
    %v123 = vunpack.c.0.s8 %v122
    %v124 = vlaneseq
    %v125 = vshrl.u32 %v124, 7
    %v126 = vsub.s32 %v123, %v125
    %v127 = vrot.slane %v116, %v126
    %v129 = vunpack.c.l.s4 1983009808
    %v130 = vunpack.c.0.s8 %v129
    %v131 = vlaneseq
    %v132 = vshrl.u32 %v131, 7
    %v133 = vsub.s32 %v130, %v132
    %v134 = vrot.slane %v120, %v133
    %v135 = vcombine.high %v127, %v127
    %v136 = vcombine.high %v134, %v134
    %v137 = vcombine.high %v117, %v117
    %v139 = vunpack.c.l.s4 1983009808
    %v140 = vunpack.c.0.s8 %v139
    %v141 = vlaneseq
    %v142 = vshrl.u32 %v141, 7
    %v143 = vsub.s32 %v140, %v142
    %v144 = vrot.slane %v117, %v143
    %v146 = vunpack.c.l.s4 1983009808
    %v147 = vunpack.c.0.s8 %v146
    %v148 = vlaneseq
    %v149 = vshrl.u32 %v148, 7
    %v150 = vsub.s32 %v147, %v149
    %v151 = vrot.slane %v137, %v150
    %v152 = vcombine.high %v144, %v144
    %v153 = vcombine.high %v151, %v151
    %v162 = vsel %vm94, %v127, 0.0
    %v163 = vsel %vm94, %v135, 0.0
    %v164 = vadd.f32 %v162, %v163
    %v165 = vsel %vm94, %v134, 0.0
    %v166 = vadd.f32 %v164, %v165
    %v167 = vsel %vm94, %v136, 0.0
    %v168 = vadd.f32 %v166, %v167
    %v169 = vsel %vm94, %v144, 0.0
    %v170 = vadd.f32 %v168, %v169
    %v171 = vsel %vm94, %v152, 0.0
    %v172 = vadd.f32 %v170, %v171
    %v173 = vsel %vm94, %v151, 0.0
    %v174 = vadd.f32 %v172, %v173
    %v175 = vsel %vm94, %v153, 0.0
    %v176 = vadd.f32 %v174, %v175
    %177 = vadd.xlane.f32.xlu0 %v176
    %v178 = vpop.xlane.xlu0 %177
    %v179 = vadd.f32 %v115, %v178
    %180 = vst.msk [vmem:[#allocation3] sm:$0x3] %vm113, %v179
    // Predicated region
    $region22: #{tpu_custom_call.1} parent=1 // pred_check
      %p181 = pneg %p36
    $region23: #{tpu_custom_call.1} parent=1 // pred_check_branch
      %183 = sbr.rel (%p181) target = $region25
    $region24: #{tpu_custom_call.1} parent=1 // pred_region
      %v184 = vld [vmem:[#allocation2] sm:$0x3]
      %v185 = vld [vmem:[#allocation3] sm:$0x3]
      %v186 = vmul.f32 %v184, 2.0
      %v187 = vadd.f32 %v186, 1e-07
      %v188 = vadd.f32 %v185, 1e-07
      %v189 = vrcp.pop %v188
      %v190 = vmul.f32 %v187, %v189
      %v191 = vsub.f32 1.0, %v190
      %193 = vset.pattern.permute.xlu0 0
      %194 = vperm.xlu0 %193, %v191
      %v195 = vpop.permute.xlu0 %194
      %197 = vst [vmem:[#allocation9] sm:$0x3] %v195
    $region25: #{tpu_custom_call.1} parent=1 // pred_fallthru
      _
    // Predicated region
    $region26: #{tpu_custom_call.1} parent=1 // pred_check
      _
    $region27: #{tpu_custom_call.1} parent=1 // pred_check_branch
      %199 = sbr.rel (0) target = $region29
    $region28: #{tpu_custom_call.1} parent=1 // pred_region
      %s201 = ssub.s32 32, 32
      %202 = vsyncadd [#allocation6], %s201
      %s204 = sshll.u32 [#allocation9], 4
      %s205 = int_to_ptr.vmem [resolvable:$true] %s204
      %207 = dma.vmem_to_hbm [thread:$0]  %s205, 32, %s2, [#allocation6]
    $region29: #{tpu_custom_call.1} parent=1 // pred_fallthru
      _
    // Predicated region
    $region30: #{tpu_custom_call.1} parent=1 // pred_check
      _
    $region31: #{tpu_custom_call.1} parent=1 // pred_check_branch
      %209 = sbr.rel (0) target = $region33
    $region32: #{tpu_custom_call.1} parent=1 // pred_region
      %210 = dma.done [#allocation6], 32
    $region33: #{tpu_custom_call.1} parent=1 // pred_fallthru
      _
    %211 = vsyncpa [#allocation5], 1
    %212 = vsyncpa [#allocation8], 1
    %213 = vsyncpa [#allocation6], 1

</llo_original>
